<compile_context>
chip_gen: v7x
topology: tpu7x:2x2x1
jax: 0.10.0
libtpu: 0.0.40
codegen_flags: <defaults>
</compile_context>

<pallas_src>
import functools

import jax
import jax.numpy as jnp
from jax.experimental import pallas as pl
from jax.experimental.pallas import tpu as pltpu

LANE = 128      # lane width (last-dim tiling)
SUBLANE = 8     # sublane width (second-to-last-dim tiling)


def _round_up(n, m):
    return ((n + m - 1) // m) * m


def _cdiv(a, b):
    return -(-a // b)


# --------------------------------------------------------------------------- #
# Kernel
# --------------------------------------------------------------------------- #
def _mlp_kernel(x_ref, w1_ref, b1_ref, w2_ref, b2_ref, w3_ref, b3_ref, o_ref,
                *, activation, num_splits):
    """Fused 3-layer MLP on one (TB, *) batch tile.

    The tile is processed as `num_splits` independent row-groups so the dot
    (MXU) of one group can overlap the tanh (EUP) of the other within a step.
    """
    act = jnp.tanh if activation == "tanh" else (lambda v: v)

    w1, w2, w3 = w1_ref[...], w2_ref[...], w3_ref[...]
    b1, b2, b3 = b1_ref[...], b2_ref[...], b3_ref[...]
    cdt = w1.dtype                      # MXU operand dtype (bf16 fast path or f32)

    def layer(h, w, b):
        # f32 accumulation + f32 bias add + f32 activation regardless of cdt.
        return act(jnp.dot(h.astype(cdt), w,
                           preferred_element_type=jnp.float32) + b)

    tb = x_ref.shape[0]
    rows = tb // num_splits
    hs = [x_ref[s * rows:(s + 1) * rows, :] for s in range(num_splits)]
    for (w, b) in ((w1, b1), (w2, b2), (w3, b3)):
        hs = [layer(h, w, b) for h in hs]
    for s in range(num_splits):
        o_ref[s * rows:(s + 1) * rows, :] = hs[s].astype(o_ref.dtype)


# --------------------------------------------------------------------------- #
# One-time parameter preparation (transpose + lane padding + dtype)
# --------------------------------------------------------------------------- #
def prepare_controller_params(params, weight_dtype=jnp.bfloat16):
    """Converts PyTorch nn.Linear params (wi:(out,in), bi:(out,)) into the kernel
    layout once: wi -> (in_pad, out_pad) weight_dtype, bi -> (1, out_pad) f32,
    zero-padded so hidden/output feature dims are multiples of 128 lanes.

    Padding is mathematically inert: padded weight rows/cols and bias entries are
    0 and tanh(0)=0, so padded channels stay 0 through all three layers."""
    w1 = jnp.asarray(params["w1"], jnp.float32)
    w2 = jnp.asarray(params["w2"], jnp.float32)
    w3 = jnp.asarray(params["w3"], jnp.float32)
    b1 = jnp.asarray(params["b1"], jnp.float32)
    b2 = jnp.asarray(params["b2"], jnp.float32)
    b3 = jnp.asarray(params["b3"], jnp.float32)

    input_dim = w1.shape[1]
    h1d, h2d, out_dim = w1.shape[0], w2.shape[0], w3.shape[0]
    h1p = _round_up(h1d, LANE)
    h2p = _round_up(h2d, LANE)
    outp = _round_up(out_dim, LANE)

    def pad_w(w_t, rows, cols):   # w_t already (in, out)
        full = jnp.zeros((rows, cols), jnp.float32)
        full = full.at[:w_t.shape[0], :w_t.shape[1]].set(w_t)
        return full.astype(weight_dtype)

    def pad_b(b, cols):           # biases stay f32 (tiny; exact bias add)
        return jnp.zeros((1, cols), jnp.float32).at[0, :b.shape[0]].set(b)

    return {
        "w1": pad_w(w1.T, input_dim, h1p), "b1": pad_b(b1, h1p),
        "w2": pad_w(w2.T, h1p, h2p),       "b2": pad_b(b2, h2p),
        "w3": pad_w(w3.T, h2p, outp),      "b3": pad_b(b3, outp),
    }


# --------------------------------------------------------------------------- #
# Batch tiling: >=2 (even) grid steps, sublane/MXU-friendly tile sizes
# --------------------------------------------------------------------------- #
def _choose_batch_tiling(batch, batch_tile):
    steps = max(2, _cdiv(batch, batch_tile))
    steps += steps % 2                       # even step count -> splits over 2 TCs
    tb = _cdiv(batch, steps)
    if tb >= 128:
        tb = _round_up(tb, 128)              # MXU-friendly M granularity
    elif tb >= 2 * SUBLANE:
        tb = _round_up(tb, 2 * SUBLANE)      # keeps the 2-way intra-tile split aligned
    else:
        tb = _round_up(tb, SUBLANE)
    b_pad = max(_round_up(batch, tb), 2 * tb)
    if (b_pad // tb) % 2:                    # keep an even number of steps
        b_pad += tb
    return tb, b_pad


# --------------------------------------------------------------------------- #
# Forward wrapper
# --------------------------------------------------------------------------- #
def controller_forward(x, prepped, out_dim, activation="tanh",
                       batch_tile=1024, slice_output=True):
    """Controller forward pass using a single fused Pallas kernel.

    Args:
      x:           (B, input_dim) float32.
      prepped:     output of prepare_controller_params (call once, reuse).
      out_dim:     true (unpadded) output feature count.
      activation:  'tanh' or 'none'.
      batch_tile:  max rows per grid step (batch axis is 'parallel').
      slice_output: if False, return the (b_pad, out_pad) padded output and skip
                    the extra XLA slice pass over HBM (padded feature cols are 0).
    """
    assert activation in ("tanh", "none")
    B, in_dim = x.shape
    w1, b1 = prepped["w1"], prepped["b1"]
    w2, b2 = prepped["w2"], prepped["b2"]
    w3, b3 = prepped["w3"], prepped["b3"]
    assert w1.shape[0] == in_dim
    h1p, h2p, outp = w1.shape[1], w2.shape[1], w3.shape[1]

    tb, b_pad = _choose_batch_tiling(B, batch_tile)
    if b_pad != B:
        x = jnp.pad(x, ((0, b_pad - B), (0, 0)))
    grid = (b_pad // tb,)
    num_splits = 2 if tb % (2 * SUBLANE) == 0 else 1

    x_spec = pl.BlockSpec((tb, in_dim), lambda i: (i, 0))
    out_spec = pl.BlockSpec((tb, outp), lambda i: (i, 0))
    # Grid-invariant weights/biases: VMEM-resident and single-buffered (no point
    # double-buffering a block whose index_map never changes).
    const = lambda a: pl.BlockSpec(a.shape, lambda i: (0,) * a.ndim,
                                   pipeline_mode=pl.Buffered(1))

    # VMEM budget: double-buffered x/out tiles + single-buffered weights/biases
    # + activation temporaries, with ~25% headroom; capped at v7x physical VMEM.
    nbytes = lambda a: a.size * a.dtype.itemsize
    w_bytes = sum(nbytes(a) for a in (w1, b1, w2, b2, w3, b3))
    io_bytes = 2 * (tb * in_dim + tb * outp) * 4
    act_bytes = tb * (h1p + h2p + outp) * 4 + tb * (in_dim + h1p + h2p) * 2
    vmem_limit = int(1.25 * (w_bytes + io_bytes + act_bytes)) + (2 << 20)
    vmem_limit = min(max(vmem_limit, 8 << 20), 64 << 20)

    flops = 2 * b_pad * (in_dim * h1p + h1p * h2p + h2p * outp)
    transcendentals = b_pad * (h1p + h2p + outp) if activation == "tanh" else 0
    bytes_accessed = b_pad * in_dim * 4 + b_pad * outp * 4 + w_bytes

    kernel = functools.partial(_mlp_kernel, activation=activation,
                               num_splits=num_splits)

    out_padded = pl.pallas_call(
        kernel,
        out_shape=jax.ShapeDtypeStruct((b_pad, outp), jnp.float32),
        grid_spec=pltpu.PrefetchScalarGridSpec(
            num_scalar_prefetch=0,
            grid=grid,
            in_specs=[x_spec, const(w1), const(b1),
                      const(w2), const(b2), const(w3), const(b3)],
            out_specs=out_spec,
        ),
        compiler_params=pltpu.CompilerParams(
            dimension_semantics=("parallel",),
            vmem_limit_bytes=vmem_limit),
        cost_estimate=pl.CostEstimate(
            flops=flops,
            transcendentals=transcendentals,
            bytes_accessed=bytes_accessed),
    )(x, w1, b1, w2, b2, w3, b3)

    if not slice_output:
        return out_padded          # (b_pad, outp); feature cols >= out_dim are 0
    return out_padded[:B, :out_dim]


# --------------------------------------------------------------------------- #
# Init + pure-JAX reference
# --------------------------------------------------------------------------- #
def init_controller_params(key, input_dim, hidden_dims, output_dim):
    """Deterministic init mimicking nn.Linear default (U(-1/sqrt(fan_in), +))."""
    h1d, h2d = hidden_dims
    dims = [(input_dim, h1d), (h1d, h2d), (h2d, output_dim)]
    params = {}
    for i, (fan_in, fan_out) in enumerate(dims, start=1):
        key, kw, kb = jax.random.split(key, 3)
        bound = 1.0 / jnp.sqrt(jnp.float32(fan_in))
        params[f"w{i}"] = jax.random.uniform(
            kw, (fan_out, fan_in), jnp.float32, -bound, bound)  # PyTorch (out, in)
        params[f"b{i}"] = jax.random.uniform(
            kb, (fan_out,), jnp.float32, -bound, bound)
    return params


def controller_forward_ref(x, params, activation="tanh"):
    act = jnp.tanh if activation == "tanh" else (lambda v: v)
    h = act(x @ params["w1"].T + params["b1"])
    h = act(h @ params["w2"].T + params["b2"])
    return act(h @ params["w3"].T + params["b3"])


# TODO(synk): flat_parameters / set_parameters are host-side numpy (de)serialization
#             of weights for the ES loop and have no kernel equivalent.

if __name__ == "__main__":
    key = jax.random.PRNGKey(0)
    k_params, k_x, k_x2 = jax.random.split(key, 3)

    input_dim, hidden_dims, output_dim = 32, (32, 32), 8
    batch = 8

    params = init_controller_params(k_params, input_dim, hidden_dims, output_dim)
    x = jax.random.normal(k_x, (batch, input_dim), jnp.float32)

    # 1) f32-weight path (exact precision), tanh.
    prepped_f32 = prepare_controller_params(params, weight_dtype=jnp.float32)
    out = jax.block_until_ready(
        controller_forward(x, prepped_f32, output_dim, activation="tanh"))
    ref = controller_forward_ref(x, params, "tanh")
    assert out.shape == (batch, output_dim)
    assert jnp.allclose(out, ref, atol=1e-5, rtol=1e-5)

    # 2) f32-weight path, identity activation.
    out_id = jax.block_until_ready(
        controller_forward(x, prepped_f32, output_dim, activation="none"))
    ref_id = controller_forward_ref(x, params, "none")
    assert jnp.allclose(out_id, ref_id, atol=1e-4, rtol=1e-4)

    # 3) bf16-weight fast path (default), larger batch so the 2-way intra-tile
    #    split and multi-step parallel grid are exercised.
    x_big = jax.random.normal(k_x2, (64, input_dim), jnp.float32)
    prepped_bf16 = prepare_controller_params(params)      # bf16 weights
    out_bf = jax.block_until_ready(
        controller_forward(x_big, prepped_bf16, output_dim, activation="tanh"))
    ref_bf = controller_forward_ref(x_big, params, "tanh")
    assert out_bf.shape == (64, output_dim)
    assert jnp.allclose(out_bf, ref_bf, atol=5e-2, rtol=5e-2)

    print("KERNEL_OK")
</pallas_src>

<mosaic_0001>
module attributes {stable_mosaic.version = 11 : i64} {
  func.func @_mlp_kernel(%arg0: i32, %arg1: memref<8x32xf32, #tpu.memory_space<vmem>>, %arg2: memref<32x128xf32, #tpu.memory_space<vmem>>, %arg3: memref<1x128xf32, #tpu.memory_space<vmem>>, %arg4: memref<128x128xf32, #tpu.memory_space<vmem>>, %arg5: memref<1x128xf32, #tpu.memory_space<vmem>>, %arg6: memref<128x128xf32, #tpu.memory_space<vmem>>, %arg7: memref<1x128xf32, #tpu.memory_space<vmem>>, %arg8: memref<8x128xf32, #tpu.memory_space<vmem>>) attributes {dimension_semantics = [#tpu.dimension_semantics<parallel>], iteration_bounds = array<i64: 2>, scalar_prefetch = 0 : i64, scratch_operands = 0 : i64, tpu.core_type = #tpu.core_type<tc>, window_params = [{transform_indices = @transform_0, window_bounds = array<i64: 8, 32>}, {pipeline_mode = #tpu.pipeline_mode<synchronous>, transform_indices = @transform_1, window_bounds = array<i64: 32, 128>}, {pipeline_mode = #tpu.pipeline_mode<synchronous>, transform_indices = @transform_2, window_bounds = array<i64: 1, 128>}, {pipeline_mode = #tpu.pipeline_mode<synchronous>, transform_indices = @transform_3, window_bounds = array<i64: 128, 128>}, {pipeline_mode = #tpu.pipeline_mode<synchronous>, transform_indices = @transform_4, window_bounds = array<i64: 1, 128>}, {pipeline_mode = #tpu.pipeline_mode<synchronous>, transform_indices = @transform_5, window_bounds = array<i64: 128, 128>}, {pipeline_mode = #tpu.pipeline_mode<synchronous>, transform_indices = @transform_6, window_bounds = array<i64: 1, 128>}, {transform_indices = @transform_7, window_bounds = array<i64: 8, 128>}]} {
    %c0 = arith.constant 0 : index
    %c0_0 = arith.constant 0 : index
    %0 = vector.load %arg2[%c0, %c0_0] : memref<32x128xf32, #tpu.memory_space<vmem>>, vector<32x128xf32>
    %c0_1 = arith.constant 0 : index
    %c0_2 = arith.constant 0 : index
    %1 = vector.load %arg4[%c0_1, %c0_2] : memref<128x128xf32, #tpu.memory_space<vmem>>, vector<128x128xf32>
    %c0_3 = arith.constant 0 : index
    %c0_4 = arith.constant 0 : index
    %2 = vector.load %arg6[%c0_3, %c0_4] : memref<128x128xf32, #tpu.memory_space<vmem>>, vector<128x128xf32>
    %c0_5 = arith.constant 0 : index
    %c0_6 = arith.constant 0 : index
    %3 = vector.load %arg3[%c0_5, %c0_6] : memref<1x128xf32, #tpu.memory_space<vmem>>, vector<1x128xf32>
    %c0_7 = arith.constant 0 : index
    %c0_8 = arith.constant 0 : index
    %4 = vector.load %arg5[%c0_7, %c0_8] : memref<1x128xf32, #tpu.memory_space<vmem>>, vector<1x128xf32>
    %c0_9 = arith.constant 0 : index
    %c0_10 = arith.constant 0 : index
    %5 = vector.load %arg7[%c0_9, %c0_10] : memref<1x128xf32, #tpu.memory_space<vmem>>, vector<1x128xf32>
    %c0_11 = arith.constant 0 : index
    %c0_12 = arith.constant 0 : index
    %6 = vector.load %arg1[%c0_11, %c0_12] : memref<8x32xf32, #tpu.memory_space<vmem>>, vector<8x32xf32>
    %cst = arith.constant dense<0.000000e+00> : vector<8x128xf32>
    %7 = tpu.matmul %6, %0, %cst {dimension_numbers = #tpu.dot_dimension_numbers<[1], [0], [0], [1], [0, 0, 1, 1], [], []>} : vector<8x32xf32>, vector<32x128xf32>, vector<8x128xf32> -> vector<8x128xf32>
    %8 = vector.broadcast %3 : vector<1x128xf32> to vector<8x128xf32>
    %9 = arith.addf %7, %8 : vector<8x128xf32>
    %10 = math.tanh %9 : vector<8x128xf32>
    %cst_13 = arith.constant dense<0.000000e+00> : vector<8x128xf32>
    %11 = tpu.matmul %10, %1, %cst_13 {dimension_numbers = #tpu.dot_dimension_numbers<[1], [0], [0], [1], [0, 0, 1, 1], [], []>} : vector<8x128xf32>, vector<128x128xf32>, vector<8x128xf32> -> vector<8x128xf32>
    %12 = vector.broadcast %4 : vector<1x128xf32> to vector<8x128xf32>
    %13 = arith.addf %11, %12 : vector<8x128xf32>
    %14 = math.tanh %13 : vector<8x128xf32>
    %cst_14 = arith.constant dense<0.000000e+00> : vector<8x128xf32>
    %15 = tpu.matmul %14, %2, %cst_14 {dimension_numbers = #tpu.dot_dimension_numbers<[1], [0], [0], [1], [0, 0, 1, 1], [], []>} : vector<8x128xf32>, vector<128x128xf32>, vector<8x128xf32> -> vector<8x128xf32>
    %16 = vector.broadcast %5 : vector<1x128xf32> to vector<8x128xf32>
    %17 = arith.addf %15, %16 : vector<8x128xf32>
    %18 = math.tanh %17 : vector<8x128xf32>
    %c0_15 = arith.constant 0 : index
    %c0_16 = arith.constant 0 : index
    %19 = vector.load %arg8[%c0_15, %c0_16] : memref<8x128xf32, #tpu.memory_space<vmem>>, vector<8x128xf32>
    tpu.vector_store %arg8[%c0_15, %c0_16], %18 {strides = array<i32>} : memref<8x128xf32, #tpu.memory_space<vmem>>, vector<8x128xf32>,
    return
  }
  func.func @transform_0(%arg0: i32) -> (i32, i32) {
    %c0_i32 = arith.constant 0 : i32
    %c0_i32_0 = arith.constant 0 : i32
    return %arg0, %c0_i32 : i32, i32
  }
  func.func @transform_1(%arg0: i32) -> (i32, i32) {
    %c0_i32 = arith.constant 0 : i32
    %c0_i32_0 = arith.constant 0 : i32
    %c0_i32_1 = arith.constant 0 : i32
    return %c0_i32, %c0_i32_0 : i32, i32
  }
  func.func @transform_2(%arg0: i32) -> (i32, i32) {
    %c0_i32 = arith.constant 0 : i32
    %c0_i32_0 = arith.constant 0 : i32
    %c0_i32_1 = arith.constant 0 : i32
    return %c0_i32, %c0_i32_0 : i32, i32
  }
  func.func @transform_3(%arg0: i32) -> (i32, i32) {
    %c0_i32 = arith.constant 0 : i32
    %c0_i32_0 = arith.constant 0 : i32
    %c0_i32_1 = arith.constant 0 : i32
    return %c0_i32, %c0_i32_0 : i32, i32
  }
  func.func @transform_4(%arg0: i32) -> (i32, i32) {
    %c0_i32 = arith.constant 0 : i32
    %c0_i32_0 = arith.constant 0 : i32
    %c0_i32_1 = arith.constant 0 : i32
    return %c0_i32, %c0_i32_0 : i32, i32
  }
  func.func @transform_5(%arg0: i32) -> (i32, i32) {
    %c0_i32 = arith.constant 0 : i32
    %c0_i32_0 = arith.constant 0 : i32
    %c0_i32_1 = arith.constant 0 : i32
    return %c0_i32, %c0_i32_0 : i32, i32
  }
  func.func @transform_6(%arg0: i32) -> (i32, i32) {
    %c0_i32 = arith.constant 0 : i32
    %c0_i32_0 = arith.constant 0 : i32
    %c0_i32_1 = arith.constant 0 : i32
    return %c0_i32, %c0_i32_0 : i32, i32
  }
  func.func @transform_7(%arg0: i32) -> (i32, i32) {
    %c0_i32 = arith.constant 0 : i32
    %c0_i32_0 = arith.constant 0 : i32
    return %arg0, %c0_i32 : i32, i32
  }
}

</mosaic_0001>

<llo_original>
// kernel: tpu_custom_call.1
$region0: #{tpu_custom_call.1}
  #allocation0 [shape = 'u32[]', space=smem, size = 0x4, offset = 0x4, fixed_abs, tag = 'smem constant byte address 0x4 - core index']
  #allocation1 [shape = 'u32[144,128]{1,0:T(1,128)}', space=vmem, size = 0x12000, scoped, tag = 'internal scratch']
  %s0 = inlined_call_operand.hbm [shape: f32[16,32], index: 0, kind: input, shape index: {}]
  %s1 = inlined_call_operand.hbm [shape: f32[32,128], index: 1, kind: input, shape index: {}]
  %s2 = inlined_call_operand.vmem [shape: f32[1,128], index: 2, kind: input, shape index: {}]
  %s3 = inlined_call_operand.hbm [shape: f32[128,128], index: 3, kind: input, shape index: {}]
  %s4 = inlined_call_operand.vmem [shape: f32[1,128], index: 4, kind: input, shape index: {}]
  %s5 = inlined_call_operand.hbm [shape: f32[128,128], index: 5, kind: input, shape index: {}]
  %s6 = inlined_call_operand.vmem [shape: f32[1,128], index: 6, kind: input, shape index: {}]
  %s7 = inlined_call_operand.hbm [shape: f32[16,128], index: 7, kind: output, shape index: {}]
  %s8 = sld [smem:[#allocation0]]
  $region77: #{tpu_custom_call.1} parent=0
    _
  %s10 = ssub.s32 1, %s8
  %s11 = scalar_select 0, %s10, %s8
  $region1: #{tpu_custom_call.1} parent=0
    #allocation2 [shape = 'u8[8192]{0}', space=vmem, size = 0x2000, scoped, tag = 'input window, operand 0']
    #allocation3 [shape = 's32[2]{0}', space=sflag, size = 0x8, scoped, tag = 'scoped memory for tpu_custom_call.1']
    #allocation4 [shape = 's32[2]{0}', space=sflag, size = 0x8, scoped, tag = 'scoped memory for tpu_custom_call.1']
    #allocation5 [shape = 'u8[16384]{0}', space=vmem, size = 0x4000, scoped, tag = 'input window, operand 1, single buffered']
    #allocation6 [shape = 's32[1]{0}', space=sflag, size = 0x4, scoped, tag = 'scoped memory for tpu_custom_call.1']
    #allocation7 [shape = 'u8[65536]{0}', space=vmem, size = 0x10000, scoped, tag = 'input window, operand 3, single buffered']
    #allocation8 [shape = 'u8[65536]{0}', space=vmem, size = 0x10000, scoped, tag = 'input window, operand 5, single buffered']
    #allocation9 [shape = 's32[1]{0}', space=sflag, size = 0x4, scoped, tag = 'scoped memory for tpu_custom_call.1']
    #allocation10 [shape = 'u8[8192]{0}', space=vmem, size = 0x2000, scoped, tag = 'output window, operand 0']
    %12 = vsyncpa [#allocation3], 0
    %s13 = scalar_lea.sflag [#allocation3], 1
    %14 = vsyncpa %s13, 0
    %15 = vsyncpa [#allocation6], 0
    %16 = vsyncpa [#allocation9], 0
    %17 = vsyncpa [#allocation4], 0
    %s18 = scalar_lea.sflag [#allocation4], 1
    %19 = vsyncpa %s18, 0
    loop: start=0, step=1, limit=4
    $region2: #{tpu_custom_call.1} parent=1 // loop_pre_header
      _
    $region3: #{tpu_custom_call.1} parent=1 // loop_header
      %s21 = sphi 0, %s25
      %p22 = scmp.ge.s32.totalorder %s21, 4
      %s31 = sphi 0, %s33
      %s34 = sphi 0, %s31
      %s35 = sphi 0, %s34
      %s51 = sphi 0, %s35
      %s55 = sphi 0, %s55
      %s57 = sphi 0, %s55
      %s58 = sphi 0, %s57
      %s72 = sphi 0, %s58
      %s76 = sphi 0, %s76
      %s78 = sphi 0, %s76
      %s79 = sphi 0, %s78
      %s93 = sphi 0, %s79
      %s97 = sphi 0, %s97
      %s99 = sphi 0, %s97
      %s100 = sphi 0, %s99
      %s114 = sphi 0, %s100
      %s118 = sphi 0, %s118
      %s120 = sphi 0, %s118
      %s121 = sphi 0, %s120
      %s135 = sphi 0, %s121
      %s139 = sphi 0, %s139
      %s141 = sphi 0, %s139
      %s142 = sphi 0, %s141
      %s156 = sphi 0, %s142
      %s160 = sphi 0, %s160
      %s162 = sphi 0, %s160
      %s163 = sphi 0, %s162
      %s177 = sphi 0, %s163
      %s183 = sphi 0, %s185
      %s186 = sphi 0, %s183
      %s187 = sphi 0, %s186
      %s203 = sphi 0, %s187
    $region4: #{tpu_custom_call.1} parent=1 // loop_header_branch
      %24 = sbr.rel (%p22) target = $region8
    $region5: #{tpu_custom_call.1} parent=1 // loop_body
      %s26 = ssub.s32 %s21, 1
      %s27 = ssub.s32 %s21, 2
      %s28 = sadd.s32 %s21, 1
      %s29 = ssub.s32 %s21, %s28
      %p30 = scmp.eq.s32.totalorder %s29, 0
      %s32 = sadd.s32 %s31, 1
      %s33 = scalar_select %p30, %s31, %s32
      %p36 = pneg %p30
      %p37 = scmp.eq.s32.totalorder %s21, 1
      %p38 = por %p36, %p37
      %p39 = scmp.ne.s32.totalorder %s31, %s34
      %p40 = scmp.eq.s32.totalorder %s21, 0
      %p41 = por %p39, %p40
      %p42 = scmp.ne.s32.totalorder %s31, %s34
      %p43 = scmp.eq.s32.totalorder %s26, 1
      %p44 = por %p42, %p43
      %p45 = scmp.ne.s32.totalorder %s34, %s35
      %p46 = scmp.eq.s32.totalorder %s26, 0
      %p47 = por %p45, %p46
      %p48 = scmp.ne.s32.totalorder %s34, %s35
      %p49 = scmp.eq.s32.totalorder %s27, 1
      %p50 = por %p48, %p49
      %p52 = scmp.ne.s32.totalorder %s35, %s51
      %p53 = scmp.eq.s32.totalorder %s27, 0
      %p54 = por %p52, %p53
      %s56 = sadd.s32 %s55, 1
      %p59 = scmp.eq.s32.totalorder %s21, 1
      %p60 = scmp.ne.s32.totalorder %s55, %s57
      %p61 = scmp.eq.s32.totalorder %s21, 0
      %p62 = por %p60, %p61
      %p63 = scmp.ne.s32.totalorder %s55, %s57
      %p64 = scmp.eq.s32.totalorder %s26, 1
      %p65 = por %p63, %p64
      %p66 = scmp.ne.s32.totalorder %s57, %s58
      %p67 = scmp.eq.s32.totalorder %s26, 0
      %p68 = por %p66, %p67
      %p69 = scmp.ne.s32.totalorder %s57, %s58
      %p70 = scmp.eq.s32.totalorder %s27, 1
      %p71 = por %p69, %p70
      %p73 = scmp.ne.s32.totalorder %s58, %s72
      %p74 = scmp.eq.s32.totalorder %s27, 0
      %p75 = por %p73, %p74
      %s77 = sadd.s32 %s76, 1
      %p80 = scmp.eq.s32.totalorder %s21, 1
      %p81 = scmp.ne.s32.totalorder %s76, %s78
      %p82 = scmp.eq.s32.totalorder %s21, 0
      %p83 = por %p81, %p82
      %p84 = scmp.ne.s32.totalorder %s76, %s78
      %p85 = scmp.eq.s32.totalorder %s26, 1
      %p86 = por %p84, %p85
      %p87 = scmp.ne.s32.totalorder %s78, %s79
      %p88 = scmp.eq.s32.totalorder %s26, 0
      %p89 = por %p87, %p88
      %p90 = scmp.ne.s32.totalorder %s78, %s79
      %p91 = scmp.eq.s32.totalorder %s27, 1
      %p92 = por %p90, %p91
      %p94 = scmp.ne.s32.totalorder %s79, %s93
      %p95 = scmp.eq.s32.totalorder %s27, 0
      %p96 = por %p94, %p95
      %s98 = sadd.s32 %s97, 1
      %p101 = scmp.eq.s32.totalorder %s21, 1
      %p102 = scmp.ne.s32.totalorder %s97, %s99
      %p103 = scmp.eq.s32.totalorder %s21, 0
      %p104 = por %p102, %p103
      %p105 = scmp.ne.s32.totalorder %s97, %s99
      %p106 = scmp.eq.s32.totalorder %s26, 1
      %p107 = por %p105, %p106
      %p108 = scmp.ne.s32.totalorder %s99, %s100
      %p109 = scmp.eq.s32.totalorder %s26, 0
      %p110 = por %p108, %p109
      %p111 = scmp.ne.s32.totalorder %s99, %s100
      %p112 = scmp.eq.s32.totalorder %s27, 1
      %p113 = por %p111, %p112
      %p115 = scmp.ne.s32.totalorder %s100, %s114
      %p116 = scmp.eq.s32.totalorder %s27, 0
      %p117 = por %p115, %p116
      %s119 = sadd.s32 %s118, 1
      %p122 = scmp.eq.s32.totalorder %s21, 1
      %p123 = scmp.ne.s32.totalorder %s118, %s120
      %p124 = scmp.eq.s32.totalorder %s21, 0
      %p125 = por %p123, %p124
      %p126 = scmp.ne.s32.totalorder %s118, %s120
      %p127 = scmp.eq.s32.totalorder %s26, 1
      %p128 = por %p126, %p127
      %p129 = scmp.ne.s32.totalorder %s120, %s121
      %p130 = scmp.eq.s32.totalorder %s26, 0
      %p131 = por %p129, %p130
      %p132 = scmp.ne.s32.totalorder %s120, %s121
      %p133 = scmp.eq.s32.totalorder %s27, 1
      %p134 = por %p132, %p133
      %p136 = scmp.ne.s32.totalorder %s121, %s135
      %p137 = scmp.eq.s32.totalorder %s27, 0
      %p138 = por %p136, %p137
      %s140 = sadd.s32 %s139, 1
      %p143 = scmp.eq.s32.totalorder %s21, 1
      %p144 = scmp.ne.s32.totalorder %s139, %s141
      %p145 = scmp.eq.s32.totalorder %s21, 0
      %p146 = por %p144, %p145
      %p147 = scmp.ne.s32.totalorder %s139, %s141
      %p148 = scmp.eq.s32.totalorder %s26, 1
      %p149 = por %p147, %p148
      %p150 = scmp.ne.s32.totalorder %s141, %s142
      %p151 = scmp.eq.s32.totalorder %s26, 0
      %p152 = por %p150, %p151
      %p153 = scmp.ne.s32.totalorder %s141, %s142
      %p154 = scmp.eq.s32.totalorder %s27, 1
      %p155 = por %p153, %p154
      %p157 = scmp.ne.s32.totalorder %s142, %s156
      %p158 = scmp.eq.s32.totalorder %s27, 0
      %p159 = por %p157, %p158
      %s161 = sadd.s32 %s160, 1
      %p164 = scmp.eq.s32.totalorder %s21, 1
      %p165 = scmp.ne.s32.totalorder %s160, %s162
      %p166 = scmp.eq.s32.totalorder %s21, 0
      %p167 = por %p165, %p166
      %p168 = scmp.ne.s32.totalorder %s160, %s162
      %p169 = scmp.eq.s32.totalorder %s26, 1
      %p170 = por %p168, %p169
      %p171 = scmp.ne.s32.totalorder %s162, %s163
      %p172 = scmp.eq.s32.totalorder %s26, 0
      %p173 = por %p171, %p172
      %p174 = scmp.ne.s32.totalorder %s162, %s163
      %p175 = scmp.eq.s32.totalorder %s27, 1
      %p176 = por %p174, %p175
      %p178 = scmp.ne.s32.totalorder %s163, %s177
      %p179 = scmp.eq.s32.totalorder %s27, 0
      %p180 = por %p178, %p179
      %s181 = ssub.s32 %s21, %s28
      %p182 = scmp.eq.s32.totalorder %s181, 0
      %s184 = sadd.s32 %s183, 1
      %s185 = scalar_select %p182, %s183, %s184
      %p188 = pneg %p182
      %p189 = scmp.eq.s32.totalorder %s21, 1
      %p190 = por %p188, %p189
      %p191 = scmp.ne.s32.totalorder %s183, %s186
      %p192 = scmp.eq.s32.totalorder %s21, 0
      %p193 = por %p191, %p192
      %p194 = scmp.ne.s32.totalorder %s183, %s186
      %p195 = scmp.eq.s32.totalorder %s26, 1
      %p196 = por %p194, %p195
      %p197 = scmp.ne.s32.totalorder %s186, %s187
      %p198 = scmp.eq.s32.totalorder %s26, 0
      %p199 = por %p197, %p198
      %p200 = scmp.ne.s32.totalorder %s186, %s187
      %p201 = scmp.eq.s32.totalorder %s27, 1
      %p202 = por %p200, %p201
      %p204 = scmp.ne.s32.totalorder %s187, %s203
      %p205 = scmp.eq.s32.totalorder %s27, 0
      %p206 = por %p204, %p205
      %p207 = scmp.le.s32.totalorder 1, %s21
      %p208 = scmp.lt.s32.totalorder %s21, 3
      %p209 = pnand %p207, %p208
      %p210 = pneg %p209
      // Predicated region
      $region9: #{tpu_custom_call.1} parent=5 // pred_check
        _
      $region10: #{tpu_custom_call.1} parent=5 // pred_check_branch
        %212 = sbr.rel (%p209) target = $region12
      $region11: #{tpu_custom_call.1} parent=5 // pred_region
        %s213 = ssub.s32 %s21, 1
        // Predicated region
        $region13: #{tpu_custom_call.1} parent=11 // pred_check
          %p214 = pneg %p68
        $region14: #{tpu_custom_call.1} parent=11 // pred_check_branch
          %216 = sbr.rel (%p214) target = $region16
        $region15: #{tpu_custom_call.1} parent=11 // pred_region
          %s218 = ssub.s32 512, 512
          %219 = vsyncadd [#allocation6], %s218
          %s220 = sshll.u32 [#allocation5], 4
          %s221 = int_to_ptr.vmem [resolvable:$true] %s220
          %226 = dma.hbm_to_vmem [thread:$0]  %s1, 512, %s221, [#allocation6], 128, 128, 8
        $region16: #{tpu_custom_call.1} parent=11 // pred_fallthru
          _
        // Predicated region
        $region17: #{tpu_custom_call.1} parent=11 // pred_check
          %p227 = pneg %p89
        $region18: #{tpu_custom_call.1} parent=11 // pred_check_branch
          %229 = sbr.rel (%p227) target = $region20
        $region19: #{tpu_custom_call.1} parent=11 // pred_region
          _
        $region20: #{tpu_custom_call.1} parent=11 // pred_fallthru
          _
        // Predicated region
        $region21: #{tpu_custom_call.1} parent=11 // pred_check
          %p230 = pneg %p110
        $region22: #{tpu_custom_call.1} parent=11 // pred_check_branch
          %232 = sbr.rel (%p230) target = $region24
        $region23: #{tpu_custom_call.1} parent=11 // pred_region
          %s234 = ssub.s32 2048, 2048
          %235 = vsyncadd [#allocation6], %s234
          %s236 = sshll.u32 [#allocation7], 4
          %s237 = int_to_ptr.vmem [resolvable:$true] %s236
          %242 = dma.hbm_to_vmem [thread:$0]  %s3, 2048, %s237, [#allocation6], 128, 128, 8
        $region24: #{tpu_custom_call.1} parent=11 // pred_fallthru
          _
        // Predicated region
        $region25: #{tpu_custom_call.1} parent=11 // pred_check
          %p243 = pneg %p131
        $region26: #{tpu_custom_call.1} parent=11 // pred_check_branch
          %245 = sbr.rel (%p243) target = $region28
        $region27: #{tpu_custom_call.1} parent=11 // pred_region
          _
        $region28: #{tpu_custom_call.1} parent=11 // pred_fallthru
          _
        // Predicated region
        $region29: #{tpu_custom_call.1} parent=11 // pred_check
          %p246 = pneg %p152
        $region30: #{tpu_custom_call.1} parent=11 // pred_check_branch
          %248 = sbr.rel (%p246) target = $region32
        $region31: #{tpu_custom_call.1} parent=11 // pred_region
          %s250 = ssub.s32 2048, 2048
          %251 = vsyncadd [#allocation9], %s250
          %s252 = sshll.u32 [#allocation8], 4
          %s253 = int_to_ptr.vmem [resolvable:$true] %s252
          %258 = dma.hbm_to_vmem [thread:$0]  %s5, 2048, %s253, [#allocation9], 128, 128, 8
        $region32: #{tpu_custom_call.1} parent=11 // pred_fallthru
          _
        // Predicated region
        $region33: #{tpu_custom_call.1} parent=11 // pred_check
          %p259 = pneg %p173
        $region34: #{tpu_custom_call.1} parent=11 // pred_check_branch
          %261 = sbr.rel (%p259) target = $region36
        $region35: #{tpu_custom_call.1} parent=11 // pred_region
          _
        $region36: #{tpu_custom_call.1} parent=11 // pred_fallthru
          _
      $region12: #{tpu_custom_call.1} parent=5 // pred_fallthru
        _
      %p262 = scmp.lt.s32.totalorder %s21, 2
      // Predicated region
      $region37: #{tpu_custom_call.1} parent=5 // pred_check
        %p263 = pneg %p262
      $region38: #{tpu_custom_call.1} parent=5 // pred_check_branch
        %265 = sbr.rel (%p263) target = $region40
      $region39: #{tpu_custom_call.1} parent=5 // pred_region
        // Predicated region
        $region41: #{tpu_custom_call.1} parent=39 // pred_check
          %p266 = pneg %p41
        $region42: #{tpu_custom_call.1} parent=39 // pred_check_branch
          %268 = sbr.rel (%p266) target = $region44
        $region43: #{tpu_custom_call.1} parent=39 // pred_region
          %s269 = sand.u32 %s31, 1
          %s270 = scalar_lea.sflag [#allocation3], %s269
          %s271 = sand.u32 %s31, 1
          %s272 = smul.addr %s271, 8
          %s273 = scalar_lea.vmem [#allocation2], %s272
          %s275 = ssub.s32 128, 128
          %276 = vsyncadd %s270, %s275
          %s277 = smul.addr %s21, 128
          %s278 = scalar_lea.hbm %s0, %s277
          %s280 = sshll.u32 %s273, 4
          %s281 = int_to_ptr.vmem [resolvable:$true] %s280
          %283 = dma.hbm_to_vmem [thread:$0]  %s278, 128, %s281, %s270
        $region44: #{tpu_custom_call.1} parent=39 // pred_fallthru
          _
      $region40: #{tpu_custom_call.1} parent=5 // pred_fallthru
        _
      %p284 = scmp.le.s32.totalorder 1, %s21
      %p285 = scmp.lt.s32.totalorder %s21, 3
      %p286 = pnand %p284, %p285
      %p287 = pneg %p286
      // Predicated region
      $region45: #{tpu_custom_call.1} parent=5 // pred_check
        _
      $region46: #{tpu_custom_call.1} parent=5 // pred_check_branch
        %289 = sbr.rel (%p286) target = $region48
      $region47: #{tpu_custom_call.1} parent=5 // pred_region
        %s290 = ssub.s32 %s21, 1
        %s291 = sand.u32 %s34, 1
        %s292 = scalar_lea.sflag [#allocation3], %s291
        %s293 = sand.u32 %s34, 1
        %s294 = smul.addr %s293, 8
        %s295 = scalar_lea.vmem [#allocation2], %s294
        // Predicated region
        $region49: #{tpu_custom_call.1} parent=47 // pred_check
          %p296 = pneg %p47
        $region50: #{tpu_custom_call.1} parent=47 // pred_check_branch
          %298 = sbr.rel (%p296) target = $region52
        $region51: #{tpu_custom_call.1} parent=47 // pred_region
          %299 = dma.done %s292, 128
        $region52: #{tpu_custom_call.1} parent=47 // pred_fallthru
          _
        // Predicated region
        $region53: #{tpu_custom_call.1} parent=47 // pred_check
          %p300 = pneg %p68
        $region54: #{tpu_custom_call.1} parent=47 // pred_check_branch
          %302 = sbr.rel (%p300) target = $region56
        $region55: #{tpu_custom_call.1} parent=47 // pred_region
          %303 = dma.done [#allocation6], 512
        $region56: #{tpu_custom_call.1} parent=47 // pred_fallthru
          _
        // Predicated region
        $region57: #{tpu_custom_call.1} parent=47 // pred_check
          %p304 = pneg %p110
        $region58: #{tpu_custom_call.1} parent=47 // pred_check_branch
          %306 = sbr.rel (%p304) target = $region60
        $region59: #{tpu_custom_call.1} parent=47 // pred_region
          %307 = dma.done [#allocation6], 2048
        $region60: #{tpu_custom_call.1} parent=47 // pred_fallthru
          _
        // Predicated region
        $region61: #{tpu_custom_call.1} parent=47 // pred_check
          %p308 = pneg %p152
        $region62: #{tpu_custom_call.1} parent=47 // pred_check_branch
          %310 = sbr.rel (%p308) target = $region64
        $region63: #{tpu_custom_call.1} parent=47 // pred_region
          %311 = dma.done [#allocation9], 2048
        $region64: #{tpu_custom_call.1} parent=47 // pred_fallthru
          _
        %s312 = sand.u32 %s34, 1
        %s313 = scalar_lea.sflag [#allocation3], %s312
        %s314 = sand.u32 %s34, 1
        %s315 = smul.addr %s314, 8
        %s316 = scalar_lea.vmem [#allocation2], %s315
        %p317 = pneg %p47
        %p318 = pneg %p44
        %p319 = pneg %p68
        %p320 = pneg %p65
        %p321 = pneg %p89
        %p322 = pneg %p86
        %p323 = pneg %p110
        %p324 = pneg %p107
        %p325 = pneg %p131
        %p326 = pneg %p128
        %p327 = pneg %p152
        %p328 = pneg %p149
        %p329 = pneg %p173
        %p330 = pneg %p170
        %p331 = pneg %p199
        %p332 = pneg %p196
        %s333 = sand.u32 %s186, 1
        %s334 = scalar_lea.sflag [#allocation4], %s333
        %s335 = sand.u32 %s186, 1
        %s336 = smul.addr %s335, 8
        %s337 = scalar_lea.vmem [#allocation10], %s336
        %v338 = vld [vmem:[#allocation5] sm:$0xff]
        %v339 = vld [vmem:[#allocation5 + $0x8] sm:$0xff]
        %v340 = vld [vmem:[#allocation5 + $0x10] sm:$0xff]
        %v341 = vld [vmem:[#allocation5 + $0x18] sm:$0xff]
        %v342 = vld [vmem:[#allocation7] sm:$0xff]
        %v343 = vld [vmem:[#allocation7 + $0x8] sm:$0xff]
        %v344 = vld [vmem:[#allocation7 + $0x10] sm:$0xff]
        %v345 = vld [vmem:[#allocation7 + $0x18] sm:$0xff]
        %v346 = vld [vmem:[#allocation7 + $0x20] sm:$0xff]
        %v347 = vld [vmem:[#allocation7 + $0x28] sm:$0xff]
        %v348 = vld [vmem:[#allocation7 + $0x30] sm:$0xff]
        %v349 = vld [vmem:[#allocation7 + $0x38] sm:$0xff]
        %v350 = vld [vmem:[#allocation7 + $0x40] sm:$0xff]
        %v351 = vld [vmem:[#allocation7 + $0x48] sm:$0xff]
        %v352 = vld [vmem:[#allocation7 + $0x50] sm:$0xff]
        %v353 = vld [vmem:[#allocation7 + $0x58] sm:$0xff]
        %v354 = vld [vmem:[#allocation7 + $0x60] sm:$0xff]
        %v355 = vld [vmem:[#allocation7 + $0x68] sm:$0xff]
        %v356 = vld [vmem:[#allocation7 + $0x70] sm:$0xff]
        %v357 = vld [vmem:[#allocation7 + $0x78] sm:$0xff]
        %v358 = vld [vmem:[#allocation8] sm:$0xff]
        %v359 = vld [vmem:[#allocation8 + $0x8] sm:$0xff]
        %v360 = vld [vmem:[#allocation8 + $0x10] sm:$0xff]
        %v361 = vld [vmem:[#allocation8 + $0x18] sm:$0xff]
        %v362 = vld [vmem:[#allocation8 + $0x20] sm:$0xff]
        %v363 = vld [vmem:[#allocation8 + $0x28] sm:$0xff]
        %v364 = vld [vmem:[#allocation8 + $0x30] sm:$0xff]
        %v365 = vld [vmem:[#allocation8 + $0x38] sm:$0xff]
        %v366 = vld [vmem:[#allocation8 + $0x40] sm:$0xff]
        %v367 = vld [vmem:[#allocation8 + $0x48] sm:$0xff]
        %v368 = vld [vmem:[#allocation8 + $0x50] sm:$0xff]
        %v369 = vld [vmem:[#allocation8 + $0x58] sm:$0xff]
        %v370 = vld [vmem:[#allocation8 + $0x60] sm:$0xff]
        %v371 = vld [vmem:[#allocation8 + $0x68] sm:$0xff]
        %v372 = vld [vmem:[#allocation8 + $0x70] sm:$0xff]
        %v373 = vld [vmem:[#allocation8 + $0x78] sm:$0xff]
        %v374 = vld [vmem:[%s2] sm:$0x1]
        %v375 = vld [vmem:[%s4] sm:$0x1]
        %v376 = vld [vmem:[%s6] sm:$0x1]
        %v377 = vld [vmem:[%s295] sm:$0xff]
        %v379 = vlaneseq
        %v380 = vshrl.u32 %v379, 7
        %v381 = vsub.s32 0, %v380
        %v382 = vrot.slane %v374, %v381
        %vm384 = vcmask 261120
        %v386 = vsel %vm384, %v377, 0
        %388 = vmatprep.subr.mxu0 0.0
        %389 = vmatpush1.msra.mxu0 %v338
        %390 = vmatprep.subr.mxu0 0.0
        %391 = vmatpush1.msra.mxu0 %v339
        %392 = vmatprep.subr.mxu0 0.0
        %393 = vmatpush1.msra.mxu0 %v340
        %394 = vmatprep.subr.mxu0 0.0
        %395 = vmatpush1.msra.mxu0 %v341
        %396 = vmatprep.subr.mxu0 0.0
        %397 = vmatpush1.msra.mxu0 0.0
        %398 = vmatprep.subr.mxu0 0.0
        %399 = vmatpush1.msra.mxu0 0.0
        %400 = vmatprep.subr.mxu0 0.0
        %401 = vmatpush1.msra.mxu0 0.0
        %402 = vmatprep.subr.mxu0 0.0
        %403 = vmatpush1.msra.mxu0 0.0
        %404 = vmatprep.subr.mxu0 0.0
        %405 = vmatpush1.msra.mxu0 0.0
        %406 = vmatprep.subr.mxu0 0.0
        %407 = vmatpush1.msra.mxu0 0.0
        %408 = vmatprep.subr.mxu0 0.0
        %409 = vmatpush1.msra.mxu0 0.0
        %410 = vmatprep.subr.mxu0 0.0
        %411 = vmatpush1.msra.mxu0 0.0
        %412 = vmatprep.subr.mxu0 0.0
        %413 = vmatpush1.msra.mxu0 0.0
        %414 = vmatprep.subr.mxu0 0.0
        %415 = vmatpush1.msra.mxu0 0.0
        %416 = vmatprep.subr.mxu0 0.0
        %417 = vmatpush1.msra.mxu0 0.0
        %418 = vmatprep.subr.mxu0 0.0
        %419 = vmatpush1.msra.mxu0 0.0
        %420 = vmatprep.subr.mxu0 0.0
        %421 = vmatpush1.msra.mxu0 0.0
        %422 = vmatprep.subr.mxu0 0.0
        %423 = vmatpush1.msra.mxu0 0.0
        %424 = vmatprep.subr.mxu0 0.0
        %425 = vmatpush1.msra.mxu0 0.0
        %426 = vmatprep.subr.mxu0 0.0
        %427 = vmatpush1.msra.mxu0 0.0
        %428 = vmatprep.subr.mxu0 0.0
        %429 = vmatpush1.msra.mxu0 0.0
        %430 = vmatprep.subr.mxu0 0.0
        %431 = vmatpush1.msra.mxu0 0.0
        %432 = vmatprep.subr.mxu0 0.0
        %433 = vmatpush1.msra.mxu0 0.0
        %434 = vmatprep.subr.mxu0 0.0
        %435 = vmatpush1.msra.mxu0 0.0
        %436 = vmatprep.subr.mxu0 0.0
        %437 = vmatpush1.msra.mxu0 0.0
        %438 = vmatprep.subr.mxu0 0.0
        %439 = vmatpush1.msra.mxu0 0.0
        %440 = vmatprep.subr.mxu0 0.0
        %441 = vmatpush1.msra.mxu0 0.0
        %442 = vmatprep.subr.mxu0 0.0
        %443 = vmatpush1.msra.mxu0 0.0
        %444 = vmatprep.subr.mxu0 0.0
        %445 = vmatpush1.msra.mxu0 0.0
        %446 = vmatprep.subr.mxu0 0.0
        %447 = vmatpush1.msra.mxu0 0.0
        %448 = vmatprep.subr.mxu0 0.0
        %449 = vmatpush1.msra.mxu0 0.0
        %450 = vmatprep.subr.mxu0 0.0
        %451 = vmatpush1.msra.mxu0 0.0
        %452 = vmatprep.mubr.f32.mxu0 0.0
        %453 = vmatmul.mubr.f32.gmra.mrb[0].mxu0 %v386
        %v454 = vpop.f32.mrb[0].mxu0
        %v455 = vadd.f32 %v382, %v454
        %v456 = vpop.f32.mrb[0].mxu0
        %457 = vdwg.mxu0
        %v458 = vtanh.pop %v455
        %v460 = vlaneseq
        %v461 = vshrl.u32 %v460, 7
        %v462 = vsub.s32 0, %v461
        %v463 = vrot.slane %v375, %v462
        %465 = vmatprep.subr.mxu0 0.0
        %466 = vmatpush1.msra.mxu0 %v342
        %467 = vmatprep.subr.mxu0 0.0
        %468 = vmatpush1.msra.mxu0 %v343
        %469 = vmatprep.subr.mxu0 0.0
        %470 = vmatpush1.msra.mxu0 %v344
        %471 = vmatprep.subr.mxu0 0.0
        %472 = vmatpush1.msra.mxu0 %v345
        %473 = vmatprep.subr.mxu0 0.0
        %474 = vmatpush1.msra.mxu0 %v346
        %475 = vmatprep.subr.mxu0 0.0
        %476 = vmatpush1.msra.mxu0 %v347
        %477 = vmatprep.subr.mxu0 0.0
        %478 = vmatpush1.msra.mxu0 %v348
        %479 = vmatprep.subr.mxu0 0.0
        %480 = vmatpush1.msra.mxu0 %v349
        %481 = vmatprep.subr.mxu0 0.0
        %482 = vmatpush1.msra.mxu0 %v350
        %483 = vmatprep.subr.mxu0 0.0
        %484 = vmatpush1.msra.mxu0 %v351
        %485 = vmatprep.subr.mxu0 0.0
        %486 = vmatpush1.msra.mxu0 %v352
        %487 = vmatprep.subr.mxu0 0.0
        %488 = vmatpush1.msra.mxu0 %v353
        %489 = vmatprep.subr.mxu0 0.0
        %490 = vmatpush1.msra.mxu0 %v354
        %491 = vmatprep.subr.mxu0 0.0
        %492 = vmatpush1.msra.mxu0 %v355
        %493 = vmatprep.subr.mxu0 0.0
        %494 = vmatpush1.msra.mxu0 %v356
        %495 = vmatprep.subr.mxu0 0.0
        %496 = vmatpush1.msra.mxu0 %v357
        %497 = vmatprep.subr.mxu0 0.0
        %498 = vmatpush1.msra.mxu0 0.0
        %499 = vmatprep.subr.mxu0 0.0
        %500 = vmatpush1.msra.mxu0 0.0
        %501 = vmatprep.subr.mxu0 0.0
        %502 = vmatpush1.msra.mxu0 0.0
        %503 = vmatprep.subr.mxu0 0.0
        %504 = vmatpush1.msra.mxu0 0.0
        %505 = vmatprep.subr.mxu0 0.0
        %506 = vmatpush1.msra.mxu0 0.0
        %507 = vmatprep.subr.mxu0 0.0
        %508 = vmatpush1.msra.mxu0 0.0
        %509 = vmatprep.subr.mxu0 0.0
        %510 = vmatpush1.msra.mxu0 0.0
        %511 = vmatprep.subr.mxu0 0.0
        %512 = vmatpush1.msra.mxu0 0.0
        %513 = vmatprep.subr.mxu0 0.0
        %514 = vmatpush1.msra.mxu0 0.0
        %515 = vmatprep.subr.mxu0 0.0
        %516 = vmatpush1.msra.mxu0 0.0
        %517 = vmatprep.subr.mxu0 0.0
        %518 = vmatpush1.msra.mxu0 0.0
        %519 = vmatprep.subr.mxu0 0.0
        %520 = vmatpush1.msra.mxu0 0.0
        %521 = vmatprep.subr.mxu0 0.0
        %522 = vmatpush1.msra.mxu0 0.0
        %523 = vmatprep.subr.mxu0 0.0
        %524 = vmatpush1.msra.mxu0 0.0
        %525 = vmatprep.subr.mxu0 0.0
        %526 = vmatpush1.msra.mxu0 0.0
        %527 = vmatprep.subr.mxu0 0.0
        %528 = vmatpush1.msra.mxu0 0.0
        %529 = vmatprep.mubr.f32.mxu0 0.0
        %530 = vmatmul.mubr.f32.gmra.mrb[0].mxu0 %v458
        %v531 = vpop.f32.mrb[0].mxu0
        %v532 = vadd.f32 %v463, %v531
        %v533 = vpop.f32.mrb[0].mxu0
        %534 = vdwg.mxu0
        %v535 = vtanh.pop %v532
        %v537 = vlaneseq
        %v538 = vshrl.u32 %v537, 7
        %v539 = vsub.s32 0, %v538
        %v540 = vrot.slane %v376, %v539
        %542 = vmatprep.subr.mxu0 0.0
        %543 = vmatpush1.msra.mxu0 %v358
        %544 = vmatprep.subr.mxu0 0.0
        %545 = vmatpush1.msra.mxu0 %v359
        %546 = vmatprep.subr.mxu0 0.0
        %547 = vmatpush1.msra.mxu0 %v360
        %548 = vmatprep.subr.mxu0 0.0
        %549 = vmatpush1.msra.mxu0 %v361
        %550 = vmatprep.subr.mxu0 0.0
        %551 = vmatpush1.msra.mxu0 %v362
        %552 = vmatprep.subr.mxu0 0.0
        %553 = vmatpush1.msra.mxu0 %v363
        %554 = vmatprep.subr.mxu0 0.0
        %555 = vmatpush1.msra.mxu0 %v364
        %556 = vmatprep.subr.mxu0 0.0
        %557 = vmatpush1.msra.mxu0 %v365
        %558 = vmatprep.subr.mxu0 0.0
        %559 = vmatpush1.msra.mxu0 %v366
        %560 = vmatprep.subr.mxu0 0.0
        %561 = vmatpush1.msra.mxu0 %v367
        %562 = vmatprep.subr.mxu0 0.0
        %563 = vmatpush1.msra.mxu0 %v368
        %564 = vmatprep.subr.mxu0 0.0
        %565 = vmatpush1.msra.mxu0 %v369
        %566 = vmatprep.subr.mxu0 0.0
        %567 = vmatpush1.msra.mxu0 %v370
        %568 = vmatprep.subr.mxu0 0.0
        %569 = vmatpush1.msra.mxu0 %v371
        %570 = vmatprep.subr.mxu0 0.0
        %571 = vmatpush1.msra.mxu0 %v372
        %572 = vmatprep.subr.mxu0 0.0
        %573 = vmatpush1.msra.mxu0 %v373
        %574 = vmatprep.subr.mxu0 0.0
        %575 = vmatpush1.msra.mxu0 0.0
        %576 = vmatprep.subr.mxu0 0.0
        %577 = vmatpush1.msra.mxu0 0.0
        %578 = vmatprep.subr.mxu0 0.0
        %579 = vmatpush1.msra.mxu0 0.0
        %580 = vmatprep.subr.mxu0 0.0
        %581 = vmatpush1.msra.mxu0 0.0
        %582 = vmatprep.subr.mxu0 0.0
        %583 = vmatpush1.msra.mxu0 0.0
        %584 = vmatprep.subr.mxu0 0.0
        %585 = vmatpush1.msra.mxu0 0.0
        %586 = vmatprep.subr.mxu0 0.0
        %587 = vmatpush1.msra.mxu0 0.0
        %588 = vmatprep.subr.mxu0 0.0
        %589 = vmatpush1.msra.mxu0 0.0
        %590 = vmatprep.subr.mxu0 0.0
        %591 = vmatpush1.msra.mxu0 0.0
        %592 = vmatprep.subr.mxu0 0.0
        %593 = vmatpush1.msra.mxu0 0.0
        %594 = vmatprep.subr.mxu0 0.0
        %595 = vmatpush1.msra.mxu0 0.0
        %596 = vmatprep.subr.mxu0 0.0
        %597 = vmatpush1.msra.mxu0 0.0
        %598 = vmatprep.subr.mxu0 0.0
        %599 = vmatpush1.msra.mxu0 0.0
        %600 = vmatprep.subr.mxu0 0.0
        %601 = vmatpush1.msra.mxu0 0.0
        %602 = vmatprep.subr.mxu0 0.0
        %603 = vmatpush1.msra.mxu0 0.0
        %604 = vmatprep.subr.mxu0 0.0
        %605 = vmatpush1.msra.mxu0 0.0
        %606 = vmatprep.mubr.f32.mxu0 0.0
        %607 = vmatmul.mubr.f32.gmra.mrb[0].mxu0 %v535
        %v608 = vpop.f32.mrb[0].mxu0
        %v609 = vadd.f32 %v540, %v608
        %v610 = vpop.f32.mrb[0].mxu0
        %611 = vdwg.mxu0
        %v612 = vtanh.pop %v609
        %613 = vst [vmem:[%s337] sm:$0xff] %v612
        %s614 = sand.u32 %s186, 1
        %s615 = scalar_lea.sflag [#allocation4], %s614
        %s616 = sand.u32 %s186, 1
        %s617 = smul.addr %s616, 8
        %s618 = scalar_lea.vmem [#allocation10], %s617
        // Predicated region
        $region65: #{tpu_custom_call.1} parent=47 // pred_check
          %p619 = pneg %p196
        $region66: #{tpu_custom_call.1} parent=47 // pred_check_branch
          %621 = sbr.rel (%p619) target = $region68
        $region67: #{tpu_custom_call.1} parent=47 // pred_region
          %s623 = ssub.s32 128, 128
          %624 = vsyncadd %s615, %s623
          %s625 = smul.addr %s26, 128
          %s626 = scalar_lea.hbm %s7, %s625
          %s628 = sshll.u32 %s618, 4
          %s629 = int_to_ptr.vmem [resolvable:$true] %s628
          %631 = dma.vmem_to_hbm [thread:$0]  %s629, 128, %s626, %s615
        $region68: #{tpu_custom_call.1} parent=47 // pred_fallthru
          _
      $region48: #{tpu_custom_call.1} parent=5 // pred_fallthru
        _
      %p632 = scmp.le.s32.totalorder 2, %s21
      // Predicated region
      $region69: #{tpu_custom_call.1} parent=5 // pred_check
        %p633 = pneg %p632
      $region70: #{tpu_custom_call.1} parent=5 // pred_check_branch
        %635 = sbr.rel (%p633) target = $region72
      $region71: #{tpu_custom_call.1} parent=5 // pred_region
        %s636 = ssub.s32 %s21, 2
        // Predicated region
        $region73: #{tpu_custom_call.1} parent=71 // pred_check
          %p637 = pneg %p202
        $region74: #{tpu_custom_call.1} parent=71 // pred_check_branch
          %639 = sbr.rel (%p637) target = $region76
        $region75: #{tpu_custom_call.1} parent=71 // pred_region
          %s640 = sand.u32 %s187, 1
          %s641 = scalar_lea.sflag [#allocation4], %s640
          %s642 = sand.u32 %s187, 1
          %s643 = smul.addr %s642, 8
          %s644 = scalar_lea.vmem [#allocation10], %s643
          %645 = dma.done %s641, 128
        $region76: #{tpu_custom_call.1} parent=71 // pred_fallthru
          _
      $region72: #{tpu_custom_call.1} parent=5 // pred_fallthru
        _
    $region6: #{tpu_custom_call.1} parent=1 // loop_footer
      %s25 = sadd.s32 1, %s21
    $region7: #{tpu_custom_call.1} parent=1 // loop_footer_branch
      %20 = sbr.rel target = $region3
    $region8: #{tpu_custom_call.1} parent=1 // loop_exit
      _
    %646 = vsyncpa [#allocation3], 1
    %s647 = scalar_lea.sflag [#allocation3], 1
    %648 = vsyncpa %s647, 1
    %649 = vsyncpa [#allocation6], 1
    %650 = vsyncpa [#allocation9], 1
    %651 = vsyncpa [#allocation4], 1
    %s652 = scalar_lea.sflag [#allocation4], 1
    %653 = vsyncpa %s652, 1

</llo_original>
